<compile_context>
chip_gen: v6e
topology: v6e:2x2x1
jax: 0.10.0
libtpu: 0.0.40
codegen_flags: <defaults>
</compile_context>

<pallas_src>
import functools
from math import floor, ceil

import jax
import jax.numpy as jnp
import numpy as np
from jax import lax
from jax.experimental import pallas as pl
from jax.experimental.pallas import tpu as pltpu


def find_padding_dim(input_dim, d_dim=(32, 32)):
    desired_dim = [d_dim[0], d_dim[1]]
    padding_dim = np.zeros([2, 2], dtype=int)
    padding_dim[0, 0] = int(floor((desired_dim[0] - input_dim[0]) / 2.0))
    padding_dim[0, 1] = int(ceil((desired_dim[0] - input_dim[0]) / 2.0))
    padding_dim[1, 0] = int(floor((desired_dim[1] - input_dim[1]) / 2.0))
    padding_dim[1, 1] = int(ceil((desired_dim[1] - input_dim[1]) / 2.0))
    return (padding_dim, desired_dim)


def _round_up(x, m):
    return (x + m - 1) // m * m


def _tiled_block_bytes(shape, dtype):
    """Real VMEM footprint of a block: last two dims are (sublane,128)-tiled."""
    itemsize = jnp.dtype(dtype).itemsize
    sublane = max(8, 32 // itemsize)  # 8 (f32), 16 (bf16), 32 (int8)
    *lead, h, w = shape
    n = 1
    for d in lead:
        n *= int(d)
    return n * _round_up(int(h), sublane) * _round_up(int(w), 128) * itemsize


def _divisors(n):
    return [d for d in range(1, n + 1) if n % d == 0]


def _vmem_capacity_bytes():
    try:
        cap = int(pltpu.get_tpu_info().vmem_capacity_bytes)
        if cap > 0:
            return cap
    except Exception:
        pass
    return 64 << 20  # conservative default = v7x per-core VMEM


def _choose_blocks(N, C, Hp, Wp, H, W, dtype, budget_bytes):
    """Largest (nb, cb) divisors so double-buffered in+out blocks fit budget."""

    def fits(nb, cb):
        in_b = _tiled_block_bytes((nb, cb, Hp, Wp), dtype)
        out_b = _tiled_block_bytes((nb, cb, H, W), dtype)
        return 2 * (in_b + out_b) <= budget_bytes

    cb = 1
    for d in _divisors(C):
        if fits(1, d):
            cb = d
    nb = 1
    for d in _divisors(N):
        if fits(d, cb):
            nb = d
    return nb, cb


# ---------------- Path A: narrow rows -> auto-pipelined VMEM crop ------------

def _crop_vmem_kernel(x_ref, o_ref, *, ph0, pw0, h, w):
    # x_ref: (nb, cb, Hp, Wp) full padded block read contiguously from HBM.
    # o_ref: (nb, cb, H, W) output block.  The crop is a static in-VMEM slice.
    o_ref[...] = x_ref[:, :, ph0:ph0 + h, pw0:pw0 + w]


# ---------------- Path B: wide rows -> direct HBM->HBM DMA -------------------

def _crop_hbm_kernel(x_hbm, o_hbm, sems, *, chunks, ph0, pw0, h, w):
    # x_hbm : full (N, C, Hp, Wp) input, left in HBM.
    # o_hbm : full (N, C, H, W) output, left in HBM.
    # chunks: static tuple of (axis, start, size); axis 0 = N, axis 1 = C.
    # Start all chunk DMAs (multiple in flight), then wait for all.
    copies = []
    for i, (axis, start, size) in enumerate(chunks):
        if axis == 0:
            src = x_hbm.at[pl.ds(start, size), :, pl.ds(ph0, h), pl.ds(pw0, w)]
            dst = o_hbm.at[pl.ds(start, size), :, :, :]
        else:
            src = x_hbm.at[:, pl.ds(start, size), pl.ds(ph0, h), pl.ds(pw0, w)]
            dst = o_hbm.at[:, pl.ds(start, size), :, :]
        cp = pltpu.make_async_copy(src, dst, sems.at[i])
        cp.start()
        copies.append(cp)
    for cp in copies:
        cp.wait()


class CropPallas:
    """JAX/Pallas equivalent of the PyTorch Crop module."""

    def __init__(self, model_shape, d_dim=None, downsample_num=3,
                 pallas_min_out_bytes=1 << 20):
        self.model_shape = tuple(int(s) for s in model_shape)
        self.pallas_min_out_bytes = int(pallas_min_out_bytes)
        self.d_dim = d_dim
        if d_dim is None:
            f = 2 ** downsample_num
            h, w = self.model_shape[2], self.model_shape[3]
            d_dim0 = h if h % f == 0 else h + f - h % f
            d_dim1 = w if w % f == 0 else w + f - w % f
            self.d_dim = [d_dim0, d_dim1]
        self.padding_dim, self.desired_dim = find_padding_dim(
            input_dim=np.array(self.model_shape[2:]), d_dim=self.d_dim
        )

    def __call__(self, x):
        N, C, H, W = self.model_shape
        Hp, Wp = int(self.d_dim[0]), int(self.d_dim[1])
        ph0 = int(self.padding_dim[0, 0])
        pw0 = int(self.padding_dim[1, 0])
        # Guard against negative padding (model_shape larger than d_dim).
        assert ph0 >= 0 and pw0 >= 0, "model_shape[2:] must not exceed d_dim"
        assert x.shape == (N, C, Hp, Wp), (x.shape, (N, C, Hp, Wp))

        # PyTorch branch 1: nothing to crop.
        if H == Hp and W == Wp:
            return x

        itemsize = jnp.dtype(x.dtype).itemsize
        out_bytes = N * C * H * W * itemsize

        # Tiny tensors: XLA's fused slice beats any kernel launch overhead.
        if out_bytes < self.pallas_min_out_bytes:
            return lax.slice(x, (0, 0, ph0, pw0), (N, C, ph0 + H, pw0 + W))

        # Contiguous-run length of the cropped source in HBM (NCHW layout):
        # full-width crop => whole H*W plane is contiguous, else one row of W.
        run_bytes = (H * W if (W == Wp and pw0 == 0) else W) * itemsize

        if run_bytes >= 512:
            return self._crop_hbm_to_hbm(x, N, C, H, W, ph0, pw0, itemsize)
        return self._crop_via_vmem(x, N, C, Hp, Wp, H, W, ph0, pw0, itemsize)

    # -- direct HBM->HBM DMA (wide contiguous runs) ---------------------------
    def _crop_hbm_to_hbm(self, x, N, C, H, W, ph0, pw0, itemsize):
        MAX_INFLIGHT = 4
        if N >= 2:
            axis, total = 0, N
        else:
            axis, total = 1, C
        nchunks = max(1, min(MAX_INFLIGHT, total))
        base, rem = divmod(total, nchunks)
        chunks, start = [], 0
        for i in range(nchunks):
            size = base + (1 if i < rem else 0)
            chunks.append((axis, start, size))
            start += size
        chunks = tuple(chunks)

        kernel = functools.partial(
            _crop_hbm_kernel, chunks=chunks, ph0=ph0, pw0=pw0, h=H, w=W
        )
        return pl.pallas_call(
            kernel,
            out_shape=jax.ShapeDtypeStruct((N, C, H, W), x.dtype),
            grid_spec=pltpu.PrefetchScalarGridSpec(
                num_scalar_prefetch=0,
                grid=(1,),
                in_specs=[pl.BlockSpec(memory_space=pl.ANY)],
                out_specs=pl.BlockSpec(memory_space=pl.ANY),
                scratch_shapes=[pltpu.SemaphoreType.DMA((nchunks,))],
            ),
            compiler_params=pltpu.CompilerParams(
                dimension_semantics=("arbitrary",),
            ),
            cost_estimate=pl.CostEstimate(
                flops=0, transcendentals=0,
                bytes_accessed=2 * N * C * H * W * itemsize,
            ),
        )(x)

    # -- auto-pipelined full-block read + in-VMEM crop (narrow rows) ----------
    def _crop_via_vmem(self, x, N, C, Hp, Wp, H, W, ph0, pw0, itemsize):
        vmem_cap = _vmem_capacity_bytes()
        budget = vmem_cap // 4  # 32 MiB on v5e/v6e, 16 MiB on v7x
        nb, cb = _choose_blocks(N, C, Hp, Wp, H, W, x.dtype, budget)

        in_blk = _tiled_block_bytes((nb, cb, Hp, Wp), x.dtype)
        out_blk = _tiled_block_bytes((nb, cb, H, W), x.dtype)
        needed = 2 * (in_blk + out_blk) + (2 << 20)  # double-buffered + margin
        vmem_limit = int(min(max(needed, 32 << 20), vmem_cap))

        kernel = functools.partial(
            _crop_vmem_kernel, ph0=ph0, pw0=pw0, h=H, w=W
        )
        return pl.pallas_call(
            kernel,
            out_shape=jax.ShapeDtypeStruct((N, C, H, W), x.dtype),
            grid_spec=pltpu.PrefetchScalarGridSpec(
                num_scalar_prefetch=0,
                grid=(N // nb, C // cb),
                in_specs=[
                    pl.BlockSpec((nb, cb, Hp, Wp), lambda n, c: (n, c, 0, 0)),
                ],
                out_specs=pl.BlockSpec((nb, cb, H, W), lambda n, c: (n, c, 0, 0)),
            ),
            compiler_params=pltpu.CompilerParams(
                dimension_semantics=("parallel", "parallel"),
                vmem_limit_bytes=vmem_limit,
            ),
            cost_estimate=pl.CostEstimate(
                flops=0, transcendentals=0,
                bytes_accessed=(N * C * Hp * Wp + N * C * H * W) * itemsize,
            ),
        )(x)


def _reference_crop(x, crop):
    ph = crop.padding_dim
    Hp, Wp = int(crop.d_dim[0]), int(crop.d_dim[1])
    h0, h1 = int(ph[0, 0]), int(ph[0, 1])
    w0, w1 = int(ph[1, 0]), int(ph[1, 1])
    return x[:, :, h0:Hp - h1 if h1 > 0 else Hp, w0:Wp - w1 if w1 > 0 else Wp]


if __name__ == "__main__":
    key = jax.random.PRNGKey(0)
    k1, k2, k3 = jax.random.split(key, 3)

    # Case 1: narrow rows (W=10 f32 -> 40 B run) => VMEM path.
    ms1 = (2, 4, 13, 10)
    crop1 = CropPallas(ms1, d_dim=None, downsample_num=3, pallas_min_out_bytes=0)
    x1 = jax.random.normal(k1, (ms1[0], ms1[1], crop1.d_dim[0], crop1.d_dim[1]),
                           dtype=jnp.float32)
    y1 = jax.block_until_ready(crop1(x1))
    assert y1.shape == ms1, (y1.shape, ms1)
    np.testing.assert_array_equal(np.asarray(y1), np.asarray(_reference_crop(x1, crop1)))

    # Case 2: wide rows (W=130 f32 -> 520 B run) => direct HBM->HBM DMA path.
    ms2 = (2, 4, 13, 130)
    crop2 = CropPallas(ms2, d_dim=None, downsample_num=3, pallas_min_out_bytes=0)
    x2 = jax.random.normal(k2, (ms2[0], ms2[1], crop2.d_dim[0], crop2.d_dim[1]),
                           dtype=jnp.float32)
    y2 = jax.block_until_ready(crop2(x2))
    assert y2.shape == ms2, (y2.shape, ms2)
    np.testing.assert_array_equal(np.asarray(y2), np.asarray(_reference_crop(x2, crop2)))

    # Case 3: crop only H (W already aligned) -> full-width planes are
    # contiguous => HBM->HBM DMA path; matches PyTorch branch 3.
    ms3 = (2, 4, 13, 16)
    crop3 = CropPallas(ms3, d_dim=None, downsample_num=3, pallas_min_out_bytes=0)
    x3 = jax.random.normal(k3, (ms3[0], ms3[1], crop3.d_dim[0], crop3.d_dim[1]),
                           dtype=jnp.float32)
    y3 = jax.block_until_ready(crop3(x3))
    assert y3.shape == ms3, (y3.shape, ms3)
    np.testing.assert_array_equal(np.asarray(y3), np.asarray(_reference_crop(x3, crop3)))

    # Case 4: default tiny-tensor fast path (lax.slice bypass).
    crop4 = CropPallas(ms1, d_dim=None, downsample_num=3)  # default 1 MiB threshold
    y4 = jax.block_until_ready(crop4(x1))
    np.testing.assert_array_equal(np.asarray(y4), np.asarray(_reference_crop(x1, crop4)))

    print("KERNEL_OK")
</pallas_src>

<mosaic_0001>
module attributes {stable_mosaic.version = 11 : i64} {
  func.func @_crop_vmem_kernel(%arg0: i32, %arg1: i32, %arg2: memref<2x4x16x16xf32, #tpu.memory_space<vmem>>, %arg3: memref<2x4x13x10xf32, #tpu.memory_space<vmem>>) attributes {dimension_semantics = [#tpu.dimension_semantics<parallel>, #tpu.dimension_semantics<parallel>], iteration_bounds = array<i64: 1, 1>, scalar_prefetch = 0 : i64, scratch_operands = 0 : i64, tpu.core_type = #tpu.core_type<tc>, window_params = [{transform_indices = @transform_0, window_bounds = array<i64: 2, 4, 16, 16>}, {transform_indices = @transform_1, window_bounds = array<i64: 2, 4, 13, 10>}]} {
    %c0 = arith.constant 0 : index
    %c0_0 = arith.constant 0 : index
    %c1 = arith.constant 1 : index
    %c3 = arith.constant 3 : index
    %0 = vector.load %arg2[%c0, %c0_0, %c1, %c3] : memref<2x4x16x16xf32, #tpu.memory_space<vmem>>, vector<2x4x13x10xf32>
    %c0_1 = arith.constant 0 : index
    %c0_2 = arith.constant 0 : index
    %c0_3 = arith.constant 0 : index
    %c0_4 = arith.constant 0 : index
    %1 = vector.load %arg3[%c0_1, %c0_2, %c0_3, %c0_4] : memref<2x4x13x10xf32, #tpu.memory_space<vmem>>, vector<2x4x13x10xf32>
    tpu.vector_store %arg3[%c0_1, %c0_2, %c0_3, %c0_4], %0 {strides = array<i32>} : memref<2x4x13x10xf32, #tpu.memory_space<vmem>>, vector<2x4x13x10xf32>,
    return
  }
  func.func @transform_0(%arg0: i32, %arg1: i32) -> (i32, i32, i32, i32) {
    %c0_i32 = arith.constant 0 : i32
    %c0_i32_0 = arith.constant 0 : i32
    %c0_i32_1 = arith.constant 0 : i32
    return %arg0, %arg1, %c0_i32, %c0_i32_0 : i32, i32, i32, i32
  }
  func.func @transform_1(%arg0: i32, %arg1: i32) -> (i32, i32, i32, i32) {
    %c0_i32 = arith.constant 0 : i32
    %c0_i32_0 = arith.constant 0 : i32
    %c0_i32_1 = arith.constant 0 : i32
    return %arg0, %arg1, %c0_i32, %c0_i32_0 : i32, i32, i32, i32
  }
}

</mosaic_0001>

<llo_original>
// kernel: tpu_custom_call.1
$region0: #{tpu_custom_call.1}
  #allocation0 [shape = 'u32[]', space=smem, size = 0x4, offset = 0x4, fixed_abs, tag = 'smem constant byte address 0x4 - core index']
  #allocation1 [shape = 'u32[144,128]{1,0:T(1,128)}', space=vmem, size = 0x12000, scoped, tag = 'internal scratch']
  %s0 = inlined_call_operand.hbm [shape: f32[2,4,16,16], index: 0, kind: input, shape index: {}]
  %s1 = inlined_call_operand.vmem [shape: f32[2,4,13,10], index: 1, kind: output, shape index: {}]
  %s2 = sld [smem:[#allocation0]]
  $region18: #{tpu_custom_call.1} parent=0
    _
  %s4 = ssub.s32 1, %s2
  %s5 = scalar_select 0, %s4, %s2
  $region1: #{tpu_custom_call.1} parent=0
    #allocation2 [shape = 'u8[65536]{0}', space=vmem, size = 0x10000, scoped, tag = 'input window, operand 0, single buffered']
    #allocation3 [shape = 's32[1]{0}', space=sflag, size = 0x4, scoped, tag = 'scoped memory for tpu_custom_call.1']
    %6 = vsyncpa [#allocation3], 0
    // Predicated region
    $region2: #{tpu_custom_call.1} parent=1 // pred_check
      _
    $region3: #{tpu_custom_call.1} parent=1 // pred_check_branch
      %8 = sbr.rel (0) target = $region5
    $region4: #{tpu_custom_call.1} parent=1 // pred_region
      %s10 = ssub.s32 2048, 2048
      %11 = vsyncadd [#allocation3], %s10
      %s12 = sshll.u32 [#allocation2], 4
      %s13 = int_to_ptr.vmem [resolvable:$true] %s12
      %18 = dma.hbm_to_vmem [thread:$0]  %s0, 2048, %s13, [#allocation3], 128, 128, 8
    $region5: #{tpu_custom_call.1} parent=1 // pred_fallthru
      _
    // Predicated region
    $region6: #{tpu_custom_call.1} parent=1 // pred_check
      _
    $region7: #{tpu_custom_call.1} parent=1 // pred_check_branch
      %20 = sbr.rel (0) target = $region9
    $region8: #{tpu_custom_call.1} parent=1 // pred_region
      %21 = dma.done [#allocation3], 2048
    $region9: #{tpu_custom_call.1} parent=1 // pred_fallthru
      _
    %v22 = vld [vmem:[#allocation2 + $0x1] sm:$0xff]
    %v23 = vld [vmem:[#allocation2 + $0x9] sm:$0x1f]
    %v24 = vld [vmem:[#allocation2 + $0x11] sm:$0xff]
    %v25 = vld [vmem:[#allocation2 + $0x19] sm:$0x1f]
    %v26 = vld [vmem:[#allocation2 + $0x21] sm:$0xff]
    %v27 = vld [vmem:[#allocation2 + $0x29] sm:$0x1f]
    %v28 = vld [vmem:[#allocation2 + $0x31] sm:$0xff]
    %v29 = vld [vmem:[#allocation2 + $0x39] sm:$0x1f]
    %v30 = vld [vmem:[#allocation2 + $0x41] sm:$0xff]
    %v31 = vld [vmem:[#allocation2 + $0x49] sm:$0x1f]
    %v32 = vld [vmem:[#allocation2 + $0x51] sm:$0xff]
    %v33 = vld [vmem:[#allocation2 + $0x59] sm:$0x1f]
    %v34 = vld [vmem:[#allocation2 + $0x61] sm:$0xff]
    %v35 = vld [vmem:[#allocation2 + $0x69] sm:$0x1f]
    %v36 = vld [vmem:[#allocation2 + $0x71] sm:$0xff]
    %v37 = vld [vmem:[#allocation2 + $0x79] sm:$0x1f]
    %54 = vrot.lane.b32.xlu0 %v22, 125
    %v55 = vpop.permute.xlu0 %54
    %56 = vrot.lane.b32.xlu0 %v23, 125
    %v57 = vpop.permute.xlu0 %56
    %58 = vrot.lane.b32.xlu0 %v24, 125
    %v59 = vpop.permute.xlu0 %58
    %60 = vrot.lane.b32.xlu0 %v25, 125
    %v61 = vpop.permute.xlu0 %60
    %62 = vrot.lane.b32.xlu0 %v26, 125
    %v63 = vpop.permute.xlu0 %62
    %64 = vrot.lane.b32.xlu0 %v27, 125
    %v65 = vpop.permute.xlu0 %64
    %66 = vrot.lane.b32.xlu0 %v28, 125
    %v67 = vpop.permute.xlu0 %66
    %68 = vrot.lane.b32.xlu0 %v29, 125
    %v69 = vpop.permute.xlu0 %68
    %70 = vrot.lane.b32.xlu0 %v30, 125
    %v71 = vpop.permute.xlu0 %70
    %72 = vrot.lane.b32.xlu0 %v31, 125
    %v73 = vpop.permute.xlu0 %72
    %74 = vrot.lane.b32.xlu0 %v32, 125
    %v75 = vpop.permute.xlu0 %74
    %76 = vrot.lane.b32.xlu0 %v33, 125
    %v77 = vpop.permute.xlu0 %76
    %78 = vrot.lane.b32.xlu0 %v34, 125
    %v79 = vpop.permute.xlu0 %78
    %80 = vrot.lane.b32.xlu0 %v35, 125
    %v81 = vpop.permute.xlu0 %80
    %82 = vrot.lane.b32.xlu0 %v36, 125
    %v83 = vpop.permute.xlu0 %82
    %84 = vrot.lane.b32.xlu0 %v37, 125
    %v85 = vpop.permute.xlu0 %84
    %vm102 = vcmask 80896
    %103 = vst.msk [vmem:[%s1] sm:$0xff] %vm102, %v55
    %vm104 = vcmask 77824
    %105 = vst.msk [vmem:[%s1 + $0x8] sm:$0x1f] %vm104, %v57
    %106 = vst.msk [vmem:[%s1 + $0x10] sm:$0xff] %vm102, %v59
    %107 = vst.msk [vmem:[%s1 + $0x18] sm:$0x1f] %vm104, %v61
    %108 = vst.msk [vmem:[%s1 + $0x20] sm:$0xff] %vm102, %v63
    %109 = vst.msk [vmem:[%s1 + $0x28] sm:$0x1f] %vm104, %v65
    %110 = vst.msk [vmem:[%s1 + $0x30] sm:$0xff] %vm102, %v67
    %111 = vst.msk [vmem:[%s1 + $0x38] sm:$0x1f] %vm104, %v69
    %112 = vst.msk [vmem:[%s1 + $0x40] sm:$0xff] %vm102, %v71
    %113 = vst.msk [vmem:[%s1 + $0x48] sm:$0x1f] %vm104, %v73
    %114 = vst.msk [vmem:[%s1 + $0x50] sm:$0xff] %vm102, %v75
    %115 = vst.msk [vmem:[%s1 + $0x58] sm:$0x1f] %vm104, %v77
    %116 = vst.msk [vmem:[%s1 + $0x60] sm:$0xff] %vm102, %v79
    %117 = vst.msk [vmem:[%s1 + $0x68] sm:$0x1f] %vm104, %v81
    %118 = vst.msk [vmem:[%s1 + $0x70] sm:$0xff] %vm102, %v83
    %119 = vst.msk [vmem:[%s1 + $0x78] sm:$0x1f] %vm104, %v85
    // Predicated region
    $region10: #{tpu_custom_call.1} parent=1 // pred_check
      _
    $region11: #{tpu_custom_call.1} parent=1 // pred_check_branch
      %121 = sbr.rel (0) target = $region13
    $region12: #{tpu_custom_call.1} parent=1 // pred_region
      _
    $region13: #{tpu_custom_call.1} parent=1 // pred_fallthru
      _
    // Predicated region
    $region14: #{tpu_custom_call.1} parent=1 // pred_check
      _
    $region15: #{tpu_custom_call.1} parent=1 // pred_check_branch
      %123 = sbr.rel (0) target = $region17
    $region16: #{tpu_custom_call.1} parent=1 // pred_region
      _
    $region17: #{tpu_custom_call.1} parent=1 // pred_fallthru
      _
    %124 = vsyncpa [#allocation3], 1

</llo_original>
